<compile_context>
chip_gen: v7x
topology: tpu7x:2x2x1
jax: 0.10.0
libtpu: 0.0.40
codegen_flags: <defaults>
</compile_context>

<pallas_src>
import jax
import jax.numpy as jnp
from jax.experimental import pallas as pl
from jax.experimental.pallas import tpu as pltpu

# Module configuration (c_dim / hidden_size defaults; param_out_dim chosen
# non-degenerate since the module default of 0 would produce an empty output).
C_DIM = 128
HIDDEN = 128
P_OUT = 21          # param_out_dim
PAD_OUT = 128       # lane-dense padded width used only for the packed weights/biases
LEAKY_SLOPE = 0.2


def _round_up(n, m):
    return ((n + m - 1) // m) * m


def _paramnet2_kernel(x_ref, w_ref, b_ref, out_ref):
    """Fused pass: bf16 matmul -> LeakyReLU -> bf16 matmul, true-width store."""
    x = x_ref[...].astype(jnp.bfloat16)              # (TB, C)  bf16 MXU operand
    w1 = w_ref[0]                                    # (C, H)   bf16
    w2 = w_ref[1]                                    # (H, PAD_OUT) bf16 (zero-padded)
    b = b_ref[...]                                   # (2, PAD_OUT) f32
    b1 = b[0:1, :]                                   # (1, H)
    b2 = b[1:2, :]                                   # (1, PAD_OUT)

    h = jnp.dot(x, w1, preferred_element_type=jnp.float32) + b1          # (TB, H) f32
    a = jnp.maximum(h, LEAKY_SLOPE * h)                                   # LeakyReLU(0.2)
    y = jnp.dot(a.astype(jnp.bfloat16), w2,
                preferred_element_type=jnp.float32) + b2                  # (TB, PAD_OUT) f32
    out_ref[...] = y[:, :P_OUT]                                           # masked store, 21 lanes


def pack_params(params):
    """Precompute (ONCE) the packed/padded kernel operands.

    Hoisted out of the per-call forward path: at small B the kernel itself is
    ~a microsecond and re-padding/stacking weights per call dominates latency.
    Weights are cast to bf16 here (native MXU dtype); biases stay f32 so the
    bias add happens at full precision on the f32 accumulators.
    """
    w_out_pad = jnp.pad(params["w_out"], ((0, 0), (0, PAD_OUT - P_OUT)))
    b_out_pad = jnp.pad(params["b_out"], ((0, PAD_OUT - P_OUT),))
    w_all = jnp.stack([params["w1"], w_out_pad], axis=0).astype(jnp.bfloat16)  # (2, C, PAD_OUT)
    b_all = jnp.stack([params["b1"], b_out_pad], axis=0).astype(jnp.float32)   # (2, PAD_OUT)
    return w_all, b_all


def nsd_paramnet2_forward(x, w_all, b_all, *, block_b=1024):
    """x: (B, C_DIM) f32, packed params from pack_params -> (B, P_OUT) f32."""
    B, C = x.shape
    assert C == C_DIM, (C, C_DIM)

    # Pad B to a multiple of 8 sublanes and pick a batch tile.  Cap the tile so
    # the "parallel" grid axis has >= 2 steps whenever the batch can be split,
    # so both v7x TensorCores get work; v5e/v6e are unaffected (single TC).
    b_pad8 = max(8, _round_up(B, 8))
    tb = min(block_b, b_pad8)
    if b_pad8 > 8:
        tb = min(tb, _round_up((b_pad8 + 1) // 2, 8))
    b_pad = _round_up(b_pad8, tb)
    x_p = jnp.pad(x, ((0, b_pad - B), (0, 0))) if b_pad != B else x
    grid = (b_pad // tb,)

    out = pl.pallas_call(
        _paramnet2_kernel,
        out_shape=jax.ShapeDtypeStruct((b_pad, P_OUT), jnp.float32),
        grid_spec=pltpu.PrefetchScalarGridSpec(
            num_scalar_prefetch=0,
            grid=grid,
            in_specs=[
                pl.BlockSpec((tb, C_DIM), lambda i: (i, 0)),                # x tile
                pl.BlockSpec((2, C_DIM, PAD_OUT), lambda i: (0, 0, 0)),     # packed weights (bf16)
                pl.BlockSpec((2, PAD_OUT), lambda i: (0, 0)),               # packed biases (f32)
            ],
            # Output block last-dim (21) equals the full array last-dim -> legal;
            # HBM writeback is 84 B/row instead of a 512 B/row padded slab.
            out_specs=pl.BlockSpec((tb, P_OUT), lambda i: (i, 0)),
        ),
        compiler_params=pltpu.CompilerParams(
            dimension_semantics=("parallel",)),
    )(x_p, w_all, b_all)

    # Only batch padding (if any) needs stripping; no lane slice anymore.
    return out[:B] if b_pad != B else out


def init_params(key):
    """Deterministic synthetic parameters (PyTorch-style uniform fan-in init).

    Conv1d weights are stored transposed as (in, out) so the kernel computes
    y = x @ W + b directly on the MXU.
    """
    ks = jax.random.split(key, 4)

    def uni(k, shape, fan_in):
        bound = 1.0 / jnp.sqrt(jnp.float32(fan_in))
        return jax.random.uniform(k, shape, jnp.float32, -bound, bound)

    return {
        "w1":    uni(ks[0], (C_DIM, HIDDEN), C_DIM),   # conv1d weight^T
        "b1":    uni(ks[1], (HIDDEN,), C_DIM),         # conv1d bias
        "w_out": uni(ks[2], (HIDDEN, P_OUT), HIDDEN),  # out_conv1d weight^T
        "b_out": uni(ks[3], (P_OUT,), HIDDEN),         # out_conv1d bias
    }


def _reference(x, p):
    """Pure-JAX f32 reference of the same forward, for a correctness check."""
    h = x @ p["w1"] + p["b1"][None, :]
    a = jnp.where(h >= 0.0, h, LEAKY_SLOPE * h)
    return a @ p["w_out"] + p["b_out"][None, :]


if __name__ == "__main__":
    key = jax.random.PRNGKey(0)
    k_x, k_p = jax.random.split(key)

    B = 4
    x = jax.random.normal(k_x, (B, C_DIM), jnp.float32)
    params = init_params(k_p)
    w_all, b_all = pack_params(params)   # hoisted out of the per-call forward path

    fwd = jax.jit(nsd_paramnet2_forward, static_argnames=("block_b",))
    out = jax.block_until_ready(fwd(x, w_all, b_all))
    ref = _reference(x, params)

    assert out.shape == (B, P_OUT), out.shape
    # bf16 MXU operands with f32 accumulation: tolerance relaxed vs. f32 ref.
    assert jnp.allclose(out, ref, atol=3e-2, rtol=3e-2), "mismatch vs pure-JAX reference"

    print("KERNEL_OK")
</pallas_src>

<mosaic_0001>
module attributes {stable_mosaic.version = 11 : i64} {
  func.func @_paramnet2_kernel(%arg0: i32, %arg1: memref<8x128xf32, #tpu.memory_space<vmem>>, %arg2: memref<2x128x128xbf16, #tpu.memory_space<vmem>>, %arg3: memref<2x128xf32, #tpu.memory_space<vmem>>, %arg4: memref<8x21xf32, #tpu.memory_space<vmem>>) attributes {dimension_semantics = [#tpu.dimension_semantics<parallel>], iteration_bounds = array<i64: 1>, scalar_prefetch = 0 : i64, scratch_operands = 0 : i64, tpu.core_type = #tpu.core_type<tc>, window_params = [{transform_indices = @transform_0, window_bounds = array<i64: 8, 128>}, {pipeline_mode = #tpu.pipeline_mode<synchronous>, transform_indices = @transform_1, window_bounds = array<i64: 2, 128, 128>}, {pipeline_mode = #tpu.pipeline_mode<synchronous>, transform_indices = @transform_2, window_bounds = array<i64: 2, 128>}, {transform_indices = @transform_3, window_bounds = array<i64: 8, 21>}]} {
    %c0 = arith.constant 0 : index
    %c0_0 = arith.constant 0 : index
    %0 = vector.load %arg1[%c0, %c0_0] : memref<8x128xf32, #tpu.memory_space<vmem>>, vector<8x128xf32>
    %1 = arith.truncf %0 : vector<8x128xf32> to vector<8x128xbf16>
    %c0_1 = arith.constant 0 : index
    %c0_2 = arith.constant 0 : index
    %c0_3 = arith.constant 0 : index
    %2 = vector.load %arg2[%c0_1, %c0_2, %c0_3] : memref<2x128x128xbf16, #tpu.memory_space<vmem>>, vector<1x128x128xbf16>
    %3 = vector.shape_cast %2 : vector<1x128x128xbf16> to vector<128x128xbf16>
    %c1 = arith.constant 1 : index
    %c0_4 = arith.constant 0 : index
    %c0_5 = arith.constant 0 : index
    %4 = vector.load %arg2[%c1, %c0_4, %c0_5] : memref<2x128x128xbf16, #tpu.memory_space<vmem>>, vector<1x128x128xbf16>
    %5 = vector.shape_cast %4 : vector<1x128x128xbf16> to vector<128x128xbf16>
    %c0_6 = arith.constant 0 : index
    %c0_7 = arith.constant 0 : index
    %6 = vector.load %arg3[%c0_6, %c0_7] : memref<2x128xf32, #tpu.memory_space<vmem>>, vector<2x128xf32>
    %7 = vector.extract_strided_slice %6 {offsets = [0, 0], sizes = [1, 128], strides = [1, 1]} : vector<2x128xf32> to vector<1x128xf32>
    %8 = vector.extract_strided_slice %6 {offsets = [1, 0], sizes = [1, 128], strides = [1, 1]} : vector<2x128xf32> to vector<1x128xf32>
    %cst = arith.constant dense<0.000000e+00> : vector<8x128xf32>
    %9 = tpu.matmul %1, %3, %cst {dimension_numbers = #tpu.dot_dimension_numbers<[1], [0], [0], [1], [0, 0, 1, 1], [], []>} : vector<8x128xbf16>, vector<128x128xbf16>, vector<8x128xf32> -> vector<8x128xf32>
    %10 = vector.broadcast %7 : vector<1x128xf32> to vector<8x128xf32>
    %11 = arith.addf %9, %10 : vector<8x128xf32>
    %cst_8 = arith.constant 2.000000e-01 : f32
    %12 = vector.broadcast %cst_8 : f32 to vector<8x128xf32>
    %13 = arith.mulf %12, %11 : vector<8x128xf32>
    %14 = arith.maximumf %11, %13 : vector<8x128xf32>
    %15 = arith.truncf %14 : vector<8x128xf32> to vector<8x128xbf16>
    %cst_9 = arith.constant dense<0.000000e+00> : vector<8x128xf32>
    %16 = tpu.matmul %15, %5, %cst_9 {dimension_numbers = #tpu.dot_dimension_numbers<[1], [0], [0], [1], [0, 0, 1, 1], [], []>} : vector<8x128xbf16>, vector<128x128xbf16>, vector<8x128xf32> -> vector<8x128xf32>
    %17 = vector.broadcast %8 : vector<1x128xf32> to vector<8x128xf32>
    %18 = arith.addf %16, %17 : vector<8x128xf32>
    %19 = vector.extract_strided_slice %18 {offsets = [0, 0], sizes = [8, 21], strides = [1, 1]} : vector<8x128xf32> to vector<8x21xf32>
    %c0_10 = arith.constant 0 : index
    %c0_11 = arith.constant 0 : index
    %20 = vector.load %arg4[%c0_10, %c0_11] : memref<8x21xf32, #tpu.memory_space<vmem>>, vector<8x21xf32>
    tpu.vector_store %arg4[%c0_10, %c0_11], %19 {strides = array<i32>} : memref<8x21xf32, #tpu.memory_space<vmem>>, vector<8x21xf32>,
    return
  }
  func.func @transform_0(%arg0: i32) -> (i32, i32) {
    %c0_i32 = arith.constant 0 : i32
    %c0_i32_0 = arith.constant 0 : i32
    return %arg0, %c0_i32 : i32, i32
  }
  func.func @transform_1(%arg0: i32) -> (i32, i32, i32) {
    %c0_i32 = arith.constant 0 : i32
    %c0_i32_0 = arith.constant 0 : i32
    %c0_i32_1 = arith.constant 0 : i32
    %c0_i32_2 = arith.constant 0 : i32
    return %c0_i32, %c0_i32_0, %c0_i32_1 : i32, i32, i32
  }
  func.func @transform_2(%arg0: i32) -> (i32, i32) {
    %c0_i32 = arith.constant 0 : i32
    %c0_i32_0 = arith.constant 0 : i32
    %c0_i32_1 = arith.constant 0 : i32
    return %c0_i32, %c0_i32_0 : i32, i32
  }
  func.func @transform_3(%arg0: i32) -> (i32, i32) {
    %c0_i32 = arith.constant 0 : i32
    %c0_i32_0 = arith.constant 0 : i32
    return %arg0, %c0_i32 : i32, i32
  }
}

</mosaic_0001>

<llo_original>
// kernel: nsd_paramnet2_forward.1
$region0: #{nsd_paramnet2_forward.1}
  #allocation0 [shape = 'u32[]', space=smem, size = 0x4, offset = 0x4, fixed_abs, tag = 'smem constant byte address 0x4 - core index']
  #allocation1 [shape = 'u32[144,128]{1,0:T(1,128)}', space=vmem, size = 0x12000, scoped, tag = 'internal scratch']
  %s0 = inlined_call_operand.vmem [shape: f32[8,128], index: 0, kind: input, shape index: {}]
  %s1 = inlined_call_operand.hbm [shape: bf16[2,128,128], index: 1, kind: input, shape index: {}]
  %s2 = inlined_call_operand.vmem [shape: f32[2,128], index: 2, kind: input, shape index: {}]
  %s3 = inlined_call_operand.vmem [shape: f32[8,21], index: 3, kind: output, shape index: {}]
  %s4 = sld [smem:[#allocation0]]
  $region26: #{nsd_paramnet2_forward.1} parent=0
    _
  %s6 = ssub.s32 1, %s4
  %s7 = scalar_select 0, %s6, %s4
  $region1: #{nsd_paramnet2_forward.1} parent=0
    #allocation2 [shape = 'u8[65536]{0}', space=vmem, size = 0x10000, scoped, tag = 'input window, operand 1, single buffered']
    #allocation3 [shape = 's32[1]{0}', space=sflag, size = 0x4, scoped, tag = 'scoped memory for nsd_paramnet2_forward.1']
    %8 = vsyncpa [#allocation3], 0
    // Predicated region
    $region2: #{nsd_paramnet2_forward.1} parent=1 // pred_check
      _
    $region3: #{nsd_paramnet2_forward.1} parent=1 // pred_check_branch
      %10 = sbr.rel (0) target = $region5
    $region4: #{nsd_paramnet2_forward.1} parent=1 // pred_region
      _
    $region5: #{nsd_paramnet2_forward.1} parent=1 // pred_fallthru
      _
    // Predicated region
    $region6: #{nsd_paramnet2_forward.1} parent=1 // pred_check
      _
    $region7: #{nsd_paramnet2_forward.1} parent=1 // pred_check_branch
      %12 = sbr.rel (0) target = $region9
    $region8: #{nsd_paramnet2_forward.1} parent=1 // pred_region
      %s14 = ssub.s32 2048, 2048
      %15 = vsyncadd [#allocation3], %s14
      %s16 = sshll.u32 [#allocation2], 4
      %s17 = int_to_ptr.vmem [resolvable:$true] %s16
      %22 = dma.hbm_to_vmem [thread:$0]  %s1, 2048, %s17, [#allocation3], 64, 64, 4
    $region9: #{nsd_paramnet2_forward.1} parent=1 // pred_fallthru
      _
    // Predicated region
    $region10: #{nsd_paramnet2_forward.1} parent=1 // pred_check
      _
    $region11: #{nsd_paramnet2_forward.1} parent=1 // pred_check_branch
      %24 = sbr.rel (0) target = $region13
    $region12: #{nsd_paramnet2_forward.1} parent=1 // pred_region
      _
    $region13: #{nsd_paramnet2_forward.1} parent=1 // pred_fallthru
      _
    // Predicated region
    $region14: #{nsd_paramnet2_forward.1} parent=1 // pred_check
      _
    $region15: #{nsd_paramnet2_forward.1} parent=1 // pred_check_branch
      %26 = sbr.rel (0) target = $region17
    $region16: #{nsd_paramnet2_forward.1} parent=1 // pred_region
      %27 = dma.done [#allocation3], 2048
    $region17: #{nsd_paramnet2_forward.1} parent=1 // pred_fallthru
      _
    %v29 = vld [vmem:[%s0] sm:$0xff]
    %v30 = vpack.c.bf16 %v29, %v29
    %v31 = vld [vmem:[#allocation2] sm:$0xf]
    %v32 = vld [vmem:[#allocation2 + $0x4] sm:$0xf]
    %v33 = vld [vmem:[#allocation2 + $0x8] sm:$0xf]
    %v34 = vld [vmem:[#allocation2 + $0xc] sm:$0xf]
    %v35 = vld [vmem:[#allocation2 + $0x10] sm:$0xf]
    %v36 = vld [vmem:[#allocation2 + $0x14] sm:$0xf]
    %v37 = vld [vmem:[#allocation2 + $0x18] sm:$0xf]
    %v38 = vld [vmem:[#allocation2 + $0x1c] sm:$0xf]
    %v39 = vld [vmem:[#allocation2 + $0x20] sm:$0xf]
    %v40 = vld [vmem:[#allocation2 + $0x24] sm:$0xf]
    %v41 = vld [vmem:[#allocation2 + $0x28] sm:$0xf]
    %v42 = vld [vmem:[#allocation2 + $0x2c] sm:$0xf]
    %v43 = vld [vmem:[#allocation2 + $0x30] sm:$0xf]
    %v44 = vld [vmem:[#allocation2 + $0x34] sm:$0xf]
    %v45 = vld [vmem:[#allocation2 + $0x38] sm:$0xf]
    %v46 = vld [vmem:[#allocation2 + $0x3c] sm:$0xf]
    %s47 = scalar_lea.vmem [#allocation2], 64
    %v48 = vld [vmem:[%s47] sm:$0xf]
    %v49 = vld [vmem:[%s47 + $0x4] sm:$0xf]
    %v50 = vld [vmem:[%s47 + $0x8] sm:$0xf]
    %v51 = vld [vmem:[%s47 + $0xc] sm:$0xf]
    %v52 = vld [vmem:[%s47 + $0x10] sm:$0xf]
    %v53 = vld [vmem:[%s47 + $0x14] sm:$0xf]
    %v54 = vld [vmem:[%s47 + $0x18] sm:$0xf]
    %v55 = vld [vmem:[%s47 + $0x1c] sm:$0xf]
    %v56 = vld [vmem:[%s47 + $0x20] sm:$0xf]
    %v57 = vld [vmem:[%s47 + $0x24] sm:$0xf]
    %v58 = vld [vmem:[%s47 + $0x28] sm:$0xf]
    %v59 = vld [vmem:[%s47 + $0x2c] sm:$0xf]
    %v60 = vld [vmem:[%s47 + $0x30] sm:$0xf]
    %v61 = vld [vmem:[%s47 + $0x34] sm:$0xf]
    %v62 = vld [vmem:[%s47 + $0x38] sm:$0xf]
    %v63 = vld [vmem:[%s47 + $0x3c] sm:$0xf]
    %v64 = vld [vmem:[%s2] sm:$0x3]
    %v65 = vlaneseq
    %v66 = vshrl.u32 %v65, 7
    %v67 = vsub.s32 0, %v66
    %v68 = vrot.slane %v64, %v67
    %v85 = vunpack.c.l.b16 %v31
    %v86 = vunpack.c.l.b16 %v32
    %v87 = vunpack.c.l.b16 %v33
    %v88 = vunpack.c.l.b16 %v34
    %v89 = vunpack.c.l.b16 %v35
    %v90 = vunpack.c.l.b16 %v36
    %v91 = vunpack.c.l.b16 %v37
    %v92 = vunpack.c.l.b16 %v38
    %v93 = vunpack.c.l.b16 %v39
    %v94 = vunpack.c.l.b16 %v40
    %v95 = vunpack.c.l.b16 %v41
    %v96 = vunpack.c.l.b16 %v42
    %v97 = vunpack.c.l.b16 %v43
    %v98 = vunpack.c.l.b16 %v44
    %v99 = vunpack.c.l.b16 %v45
    %v100 = vunpack.c.l.b16 %v46
    %v101 = vpack.c.b16 %v86, %v85
    %v102 = vpack.c.b16 %v88, %v87
    %v103 = vpack.c.b16 %v90, %v89
    %v104 = vpack.c.b16 %v92, %v91
    %v105 = vpack.c.b16 %v94, %v93
    %v106 = vpack.c.b16 %v96, %v95
    %v107 = vpack.c.b16 %v98, %v97
    %v108 = vpack.c.b16 %v100, %v99
    %117 = vmatprep.subr.bf16.mxu0 0
    %118 = vmatpush1.bf16.msra.mxu0 %v101
    %119 = vmatprep.subr.bf16.mxu0 0
    %120 = vmatpush1.bf16.msra.mxu0 %v102
    %121 = vmatprep.subr.bf16.mxu0 0
    %122 = vmatpush1.bf16.msra.mxu0 %v103
    %123 = vmatprep.subr.bf16.mxu0 0
    %124 = vmatpush1.bf16.msra.mxu0 %v104
    %125 = vmatprep.subr.bf16.mxu0 0
    %126 = vmatpush1.bf16.msra.mxu0 %v105
    %127 = vmatprep.subr.bf16.mxu0 0
    %128 = vmatpush1.bf16.msra.mxu0 %v106
    %129 = vmatprep.subr.bf16.mxu0 0
    %130 = vmatpush1.bf16.msra.mxu0 %v107
    %131 = vmatprep.subr.bf16.mxu0 0
    %132 = vmatpush1.bf16.msra.mxu0 %v108
    %133 = vmatprep.subr.bf16.mxu0 0
    %134 = vmatpush1.bf16.msra.mxu0 0
    %135 = vmatprep.subr.bf16.mxu0 0
    %136 = vmatpush1.bf16.msra.mxu0 0
    %137 = vmatprep.subr.bf16.mxu0 0
    %138 = vmatpush1.bf16.msra.mxu0 0
    %139 = vmatprep.subr.bf16.mxu0 0
    %140 = vmatpush1.bf16.msra.mxu0 0
    %141 = vmatprep.subr.bf16.mxu0 0
    %142 = vmatpush1.bf16.msra.mxu0 0
    %143 = vmatprep.subr.bf16.mxu0 0
    %144 = vmatpush1.bf16.msra.mxu0 0
    %145 = vmatprep.subr.bf16.mxu0 0
    %146 = vmatpush1.bf16.msra.mxu0 0
    %147 = vmatprep.subr.bf16.mxu0 0
    %148 = vmatpush1.bf16.msra.mxu0 0
    %149 = vmatprep.mubr.bf16.mxu0 0
    %150 = vmatmul.mubr.bf16.gmra.mrb[0].mxu0 %v30
    %v151 = vpop.f32.mrb[0].mxu0
    %v152 = vadd.f32 %v68, %v151
    %v153 = vpop.f32.mrb[0].mxu0
    %v154 = vpop.f32.mrb[0].mxu0
    %v155 = vpop.f32.mrb[0].mxu0
    %156 = vdwg.mxu0
    %v157 = vmul.f32 %v152, 0.2
    %v158 = vmax.f32 %v152, %v157
    %v159 = vpack.c.bf16 %v158, %v158
    %v160 = vlaneseq
    %v161 = vshrl.u32 %v160, 7
    %v162 = vsub.s32 1, %v161
    %v163 = vrot.slane %v64, %v162
    %v180 = vunpack.c.l.b16 %v48
    %v181 = vunpack.c.l.b16 %v49
    %v182 = vunpack.c.l.b16 %v50
    %v183 = vunpack.c.l.b16 %v51
    %v184 = vunpack.c.l.b16 %v52
    %v185 = vunpack.c.l.b16 %v53
    %v186 = vunpack.c.l.b16 %v54
    %v187 = vunpack.c.l.b16 %v55
    %v188 = vunpack.c.l.b16 %v56
    %v189 = vunpack.c.l.b16 %v57
    %v190 = vunpack.c.l.b16 %v58
    %v191 = vunpack.c.l.b16 %v59
    %v192 = vunpack.c.l.b16 %v60
    %v193 = vunpack.c.l.b16 %v61
    %v194 = vunpack.c.l.b16 %v62
    %v195 = vunpack.c.l.b16 %v63
    %v196 = vpack.c.b16 %v181, %v180
    %v197 = vpack.c.b16 %v183, %v182
    %v198 = vpack.c.b16 %v185, %v184
    %v199 = vpack.c.b16 %v187, %v186
    %v200 = vpack.c.b16 %v189, %v188
    %v201 = vpack.c.b16 %v191, %v190
    %v202 = vpack.c.b16 %v193, %v192
    %v203 = vpack.c.b16 %v195, %v194
    %212 = vmatprep.subr.bf16.mxu0 0
    %213 = vmatpush1.bf16.msra.mxu0 %v196
    %214 = vmatprep.subr.bf16.mxu0 0
    %215 = vmatpush1.bf16.msra.mxu0 %v197
    %216 = vmatprep.subr.bf16.mxu0 0
    %217 = vmatpush1.bf16.msra.mxu0 %v198
    %218 = vmatprep.subr.bf16.mxu0 0
    %219 = vmatpush1.bf16.msra.mxu0 %v199
    %220 = vmatprep.subr.bf16.mxu0 0
    %221 = vmatpush1.bf16.msra.mxu0 %v200
    %222 = vmatprep.subr.bf16.mxu0 0
    %223 = vmatpush1.bf16.msra.mxu0 %v201
    %224 = vmatprep.subr.bf16.mxu0 0
    %225 = vmatpush1.bf16.msra.mxu0 %v202
    %226 = vmatprep.subr.bf16.mxu0 0
    %227 = vmatpush1.bf16.msra.mxu0 %v203
    %228 = vmatprep.subr.bf16.mxu0 0
    %229 = vmatpush1.bf16.msra.mxu0 0
    %230 = vmatprep.subr.bf16.mxu0 0
    %231 = vmatpush1.bf16.msra.mxu0 0
    %232 = vmatprep.subr.bf16.mxu0 0
    %233 = vmatpush1.bf16.msra.mxu0 0
    %234 = vmatprep.subr.bf16.mxu0 0
    %235 = vmatpush1.bf16.msra.mxu0 0
    %236 = vmatprep.subr.bf16.mxu0 0
    %237 = vmatpush1.bf16.msra.mxu0 0
    %238 = vmatprep.subr.bf16.mxu0 0
    %239 = vmatpush1.bf16.msra.mxu0 0
    %240 = vmatprep.subr.bf16.mxu0 0
    %241 = vmatpush1.bf16.msra.mxu0 0
    %242 = vmatprep.subr.bf16.mxu0 0
    %243 = vmatpush1.bf16.msra.mxu0 0
    %244 = vmatprep.mubr.bf16.mxu0 0
    %245 = vmatmul.mubr.bf16.gmra.mrb[0].mxu0 %v159
    %v246 = vpop.f32.mrb[0].mxu0
    %v247 = vadd.f32 %v163, %v246
    %v248 = vpop.f32.mrb[0].mxu0
    %v249 = vpop.f32.mrb[0].mxu0
    %v250 = vpop.f32.mrb[0].mxu0
    %251 = vdwg.mxu0
    %vm252 = vcmask 171008
    %253 = vst.msk [vmem:[%s3] sm:$0xff] %vm252, %v247
    // Predicated region
    $region18: #{nsd_paramnet2_forward.1} parent=1 // pred_check
      _
    $region19: #{nsd_paramnet2_forward.1} parent=1 // pred_check_branch
      %255 = sbr.rel (0) target = $region21
    $region20: #{nsd_paramnet2_forward.1} parent=1 // pred_region
      _
    $region21: #{nsd_paramnet2_forward.1} parent=1 // pred_fallthru
      _
    // Predicated region
    $region22: #{nsd_paramnet2_forward.1} parent=1 // pred_check
      _
    $region23: #{nsd_paramnet2_forward.1} parent=1 // pred_check_branch
      %257 = sbr.rel (0) target = $region25
    $region24: #{nsd_paramnet2_forward.1} parent=1 // pred_region
      _
    $region25: #{nsd_paramnet2_forward.1} parent=1 // pred_fallthru
      _
    %258 = vsyncpa [#allocation3], 1

</llo_original>
